<compile_context>
chip_gen: v7x
topology: tpu7x:2x2x1
jax: 0.10.0
libtpu: 0.0.40
codegen_flags: <defaults>
</compile_context>

<pallas_src>
import functools

import jax
import jax.numpy as jnp
from jax.experimental import pallas as pl
from jax.experimental.pallas import tpu as pltpu


def _round_up(x: int, m: int) -> int:
    return (x + m - 1) // m * m


def _mlp_kernel(x_ref, w13_ref, b13_ref, w2_ref, b2_ref, o_ref, acc_ref, *, ti):
    """One (row-tile, inter-tile) step.

    x_ref   : (tm, dim)      activations (compute dtype, e.g. bf16)
    w13_ref : (dim, 2*ti)    fused column tile [w1_k | w3_k]
    b13_ref : (1, 2*ti)      fused bias tile   [b1_k | b3_k]  (f32)
    w2_ref  : (ti, dim)      row tile of the down projection
    b2_ref  : (1, dim)       output bias (f32)
    o_ref   : (tm, dim)      output tile
    acc_ref : (tm, dim) f32  accumulator, resident across the inter (k) axis
    """
    k = pl.program_id(1)

    @pl.when(k == 0)
    def _init():
        # Seed the accumulator with the output bias once per row tile.
        acc_ref[...] = jnp.zeros_like(acc_ref) + b2_ref[...]

    x = x_ref[...]
    # One wide MXU matmul covers both the gate (w1) and up (w3) projections.
    h = jnp.dot(x, w13_ref[...], preferred_element_type=jnp.float32)
    h = h + b13_ref[...]
    h1 = h[:, :ti]            # gate path
    h3 = h[:, ti:]            # up path
    gated = jax.nn.silu(h1) * h3                       # f32
    acc_ref[...] += jnp.dot(gated.astype(x.dtype), w2_ref[...],
                            preferred_element_type=jnp.float32)

    @pl.when(k == pl.num_programs(1) - 1)
    def _finalize():
        o_ref[...] = acc_ref[...].astype(o_ref.dtype)


def mlp_pallas(x, w1, b1, w3, b3, w2, b2, *,
               tm=256, ti=512, compute_dtype=jnp.bfloat16):
    """out = (silu(x @ w1 + b1) * (x @ w3 + b3)) @ w2 + b2.

    x : (..., dim).  Weights are stored pre-transposed ([in, out]) so the
    kernel does plain x @ W, matching PyTorch's y = x @ W.T + b.
    """
    orig_shape = x.shape
    out_dtype = x.dtype
    dim = x.shape[-1]
    inter = w1.shape[1]

    x2 = x.reshape(-1, dim)
    N = x2.shape[0]

    # ---- lane-dense padding and tile sizing --------------------------------
    dim_p = _round_up(dim, 128)
    ti = _round_up(min(ti, _round_up(inter, 128)), 128)
    inter_p = _round_up(inter, ti)
    n_k = inter_p // ti

    tm_eff = _round_up(min(tm, _round_up(N, 16)), 16)
    N_p = _round_up(N, tm_eff)
    n_i = N_p // tm_eff

    f32 = jnp.float32
    x_p = jnp.pad(x2, ((0, N_p - N), (0, dim_p - dim))).astype(compute_dtype)
    w1_p = jnp.pad(w1, ((0, dim_p - dim), (0, inter_p - inter)))
    w3_p = jnp.pad(w3, ((0, dim_p - dim), (0, inter_p - inter)))
    w2_p = jnp.pad(w2, ((0, inter_p - inter), (0, dim_p - dim))).astype(compute_dtype)
    b1_p = jnp.pad(b1, ((0, 0), (0, inter_p - inter))).astype(f32)
    b3_p = jnp.pad(b3, ((0, 0), (0, inter_p - inter))).astype(f32)
    b2_p = jnp.pad(b2, ((0, 0), (0, dim_p - dim))).astype(f32)

    # Fuse w1/w3 per k-tile: column block k of w13 is [w1_k | w3_k].
    w13 = jnp.concatenate(
        [w1_p.reshape(dim_p, n_k, ti), w3_p.reshape(dim_p, n_k, ti)],
        axis=2).reshape(dim_p, n_k * 2 * ti).astype(compute_dtype)
    b13 = jnp.concatenate(
        [b1_p.reshape(1, n_k, ti), b3_p.reshape(1, n_k, ti)],
        axis=2).reshape(1, n_k * 2 * ti)

    bpe = jnp.dtype(compute_dtype).itemsize
    cost = pl.CostEstimate(
        flops=int(6 * N_p * dim_p * inter_p),               # 3 matmuls (w1+w3 fused)
        transcendentals=int(N_p * inter_p),                 # sigmoid exp
        bytes_accessed=int((x_p.size + w13.size + w2_p.size) * bpe
                           + (b13.size + b2_p.size) * 4
                           + N_p * dim_p * jnp.dtype(out_dtype).itemsize),
    )

    out = pl.pallas_call(
        functools.partial(_mlp_kernel, ti=ti),
        out_shape=jax.ShapeDtypeStruct((N_p, dim_p), out_dtype),
        grid_spec=pltpu.PrefetchScalarGridSpec(
            num_scalar_prefetch=0,
            grid=(n_i, n_k),                                 # reduction axis last
            in_specs=[
                pl.BlockSpec((tm_eff, dim_p), lambda i, k: (i, 0)),   # x row tile
                pl.BlockSpec((dim_p, 2 * ti), lambda i, k: (0, k)),   # [w1_k|w3_k]
                pl.BlockSpec((1, 2 * ti), lambda i, k: (0, k)),       # [b1_k|b3_k]
                pl.BlockSpec((ti, dim_p), lambda i, k: (k, 0)),       # w2_k
                pl.BlockSpec((1, dim_p), lambda i, k: (0, 0)),        # b2
            ],
            out_specs=pl.BlockSpec((tm_eff, dim_p), lambda i, k: (i, 0)),
            scratch_shapes=[pltpu.VMEM((tm_eff, dim_p), jnp.float32)],
        ),
        compiler_params=pltpu.CompilerParams(
            dimension_semantics=("parallel", "arbitrary"),
            # Explicit scoped-VMEM budget: above every generation's default,
            # below v7x's 64 MiB physical (leaves headroom).
            vmem_limit_bytes=48 * 1024 * 1024,
        ),
        cost_estimate=cost,
    )(x_p, w13, b13, w2_p, b2_p)

    out = out[:N, :dim]
    return out.reshape(orig_shape[:-1] + (dim,))


def _init_linear(key, fan_in, fan_out, dtype=jnp.float32):
    # PyTorch nn.Linear default init: U(-1/sqrt(fan_in), 1/sqrt(fan_in))
    kw, kb = jax.random.split(key)
    bound = 1.0 / (fan_in ** 0.5)
    # Stored pre-transposed as [fan_in, fan_out] for x @ W.
    w = jax.random.uniform(kw, (fan_in, fan_out), dtype, -bound, bound)
    b = jax.random.uniform(kb, (1, fan_out), dtype, -bound, bound)
    return w, b


def mlp_reference(x, w1, b1, w3, b3, w2, b2):
    h1 = x @ w1 + b1
    h3 = x @ w3 + b3
    return (jax.nn.silu(h1) * h3) @ w2 + b2


if __name__ == "__main__":
    dim, inter_dim = 32, 64
    batch, seq = 2, 8

    key = jax.random.PRNGKey(0)
    kx, k1, k2, k3 = jax.random.split(key, 4)

    x = jax.random.normal(kx, (batch, seq, dim), jnp.float32)
    w1, b1 = _init_linear(k1, dim, inter_dim)
    w2, b2 = _init_linear(k2, inter_dim, dim)
    w3, b3 = _init_linear(k3, dim, inter_dim)

    out = mlp_pallas(x, w1, b1, w3, b3, w2, b2)
    out = jax.block_until_ready(out)

    # Reference computed in f32 from the same bf16-rounded operands the kernel
    # consumes (kernel keeps bias adds, SiLU, gate and accumulation in f32).
    rd = lambda a: a.astype(jnp.bfloat16).astype(jnp.float32)
    ref = mlp_reference(rd(x), rd(w1), b1, rd(w3), b3, rd(w2), b2)

    assert out.shape == (batch, seq, dim)
    err = float(jnp.max(jnp.abs(out - ref)))
    assert jnp.allclose(out, ref, atol=2e-2, rtol=2e-2), f"mismatch vs reference, max abs err={err}"

    print("KERNEL_OK")
</pallas_src>

<mosaic_0001>
module attributes {stable_mosaic.version = 11 : i64} {
  func.func @_mlp_kernel(%arg0: i32, %arg1: i32, %arg2: memref<16x128xbf16, #tpu.memory_space<vmem>>, %arg3: memref<128x256xbf16, #tpu.memory_space<vmem>>, %arg4: memref<1x256xf32, #tpu.memory_space<vmem>>, %arg5: memref<128x128xbf16, #tpu.memory_space<vmem>>, %arg6: memref<1x128xf32, #tpu.memory_space<vmem>>, %arg7: memref<16x128xf32, #tpu.memory_space<vmem>>, %arg8: memref<16x128xf32, #tpu.memory_space<vmem>>) attributes {dimension_semantics = [#tpu.dimension_semantics<parallel>, #tpu.dimension_semantics<arbitrary>], iteration_bounds = array<i64: 1, 1>, scalar_prefetch = 0 : i64, scratch_operands = 1 : i64, tpu.core_type = #tpu.core_type<tc>, window_params = [{transform_indices = @transform_0, window_bounds = array<i64: 16, 128>}, {transform_indices = @transform_1, window_bounds = array<i64: 128, 256>}, {transform_indices = @transform_2, window_bounds = array<i64: 1, 256>}, {transform_indices = @transform_3, window_bounds = array<i64: 128, 128>}, {pipeline_mode = #tpu.pipeline_mode<synchronous>, transform_indices = @transform_4, window_bounds = array<i64: 1, 128>}, {transform_indices = @transform_5, window_bounds = array<i64: 16, 128>}]} {
    %c0_i32 = arith.constant 0 : i32
    %0 = arith.cmpi eq, %arg1, %c0_i32 : i32
    %1 = arith.extui %0 : i1 to i32
    %c0_i32_0 = arith.constant 0 : i32
    %2 = arith.cmpi ne, %1, %c0_i32_0 : i32
    scf.if %2 {
      %cst_16 = arith.constant 0.000000e+00 : f32
      %27 = vector.broadcast %cst_16 : f32 to vector<16x128xf32>
      %c0_17 = arith.constant 0 : index
      %c0_18 = arith.constant 0 : index
      %28 = vector.load %arg6[%c0_17, %c0_18] : memref<1x128xf32, #tpu.memory_space<vmem>>, vector<1x128xf32>
      %29 = vector.broadcast %28 : vector<1x128xf32> to vector<16x128xf32>
      %30 = arith.addf %27, %29 : vector<16x128xf32>
      %c0_19 = arith.constant 0 : index
      %c0_20 = arith.constant 0 : index
      %31 = vector.load %arg8[%c0_19, %c0_20] : memref<16x128xf32, #tpu.memory_space<vmem>>, vector<16x128xf32>
      tpu.vector_store %arg8[%c0_19, %c0_20], %30 {strides = array<i32>} : memref<16x128xf32, #tpu.memory_space<vmem>>, vector<16x128xf32>,
    } else {
    }
    %c0 = arith.constant 0 : index
    %c0_1 = arith.constant 0 : index
    %3 = vector.load %arg2[%c0, %c0_1] : memref<16x128xbf16, #tpu.memory_space<vmem>>, vector<16x128xbf16>
    %c0_2 = arith.constant 0 : index
    %c0_3 = arith.constant 0 : index
    %4 = vector.load %arg3[%c0_2, %c0_3] : memref<128x256xbf16, #tpu.memory_space<vmem>>, vector<128x256xbf16>
    %cst = arith.constant dense<0.000000e+00> : vector<16x256xf32>
    %5 = tpu.matmul %3, %4, %cst {dimension_numbers = #tpu.dot_dimension_numbers<[1], [0], [0], [1], [0, 0, 1, 1], [], []>} : vector<16x128xbf16>, vector<128x256xbf16>, vector<16x256xf32> -> vector<16x256xf32>
    %c0_4 = arith.constant 0 : index
    %c0_5 = arith.constant 0 : index
    %6 = vector.load %arg4[%c0_4, %c0_5] : memref<1x256xf32, #tpu.memory_space<vmem>>, vector<1x256xf32>
    %7 = vector.broadcast %6 : vector<1x256xf32> to vector<16x256xf32>
    %8 = arith.addf %5, %7 : vector<16x256xf32>
    %9 = vector.extract_strided_slice %8 {offsets = [0, 0], sizes = [16, 128], strides = [1, 1]} : vector<16x256xf32> to vector<16x128xf32>
    %10 = vector.extract_strided_slice %8 {offsets = [0, 128], sizes = [16, 128], strides = [1, 1]} : vector<16x256xf32> to vector<16x128xf32>
    %11 = arith.negf %9 : vector<16x128xf32>
    %12 = math.exp %11 : vector<16x128xf32>
    %cst_6 = arith.constant 1.000000e+00 : f32
    %13 = vector.broadcast %cst_6 : f32 to vector<16x128xf32>
    %14 = arith.addf %13, %12 : vector<16x128xf32>
    %15 = arith.divf %13, %14 : vector<16x128xf32>
    %16 = arith.mulf %9, %15 : vector<16x128xf32>
    %17 = arith.mulf %16, %10 : vector<16x128xf32>
    %c0_7 = arith.constant 0 : index
    %c0_8 = arith.constant 0 : index
    %18 = vector.load %arg8[%c0_7, %c0_8] : memref<16x128xf32, #tpu.memory_space<vmem>>, vector<16x128xf32>
    %19 = arith.truncf %17 : vector<16x128xf32> to vector<16x128xbf16>
    %c0_9 = arith.constant 0 : index
    %c0_10 = arith.constant 0 : index
    %20 = vector.load %arg5[%c0_9, %c0_10] : memref<128x128xbf16, #tpu.memory_space<vmem>>, vector<128x128xbf16>
    %cst_11 = arith.constant dense<0.000000e+00> : vector<16x128xf32>
    %21 = tpu.matmul %19, %20, %cst_11 {dimension_numbers = #tpu.dot_dimension_numbers<[1], [0], [0], [1], [0, 0, 1, 1], [], []>} : vector<16x128xbf16>, vector<128x128xbf16>, vector<16x128xf32> -> vector<16x128xf32>
    %22 = arith.addf %18, %21 : vector<16x128xf32>
    %c0_12 = arith.constant 0 : index
    %c0_13 = arith.constant 0 : index
    %23 = vector.load %arg8[%c0_12, %c0_13] : memref<16x128xf32, #tpu.memory_space<vmem>>, vector<16x128xf32>
    tpu.vector_store %arg8[%c0_12, %c0_13], %22 {strides = array<i32>} : memref<16x128xf32, #tpu.memory_space<vmem>>, vector<16x128xf32>,
    %c0_i32_14 = arith.constant 0 : i32
    %24 = arith.cmpi eq, %arg1, %c0_i32_14 : i32
    %25 = arith.extui %24 : i1 to i32
    %c0_i32_15 = arith.constant 0 : i32
    %26 = arith.cmpi ne, %25, %c0_i32_15 : i32
    scf.if %26 {
      %c0_16 = arith.constant 0 : index
      %c0_17 = arith.constant 0 : index
      %27 = vector.load %arg8[%c0_16, %c0_17] : memref<16x128xf32, #tpu.memory_space<vmem>>, vector<16x128xf32>
      %c0_18 = arith.constant 0 : index
      %c0_19 = arith.constant 0 : index
      %28 = vector.load %arg7[%c0_18, %c0_19] : memref<16x128xf32, #tpu.memory_space<vmem>>, vector<16x128xf32>
      tpu.vector_store %arg7[%c0_18, %c0_19], %27 {strides = array<i32>} : memref<16x128xf32, #tpu.memory_space<vmem>>, vector<16x128xf32>,
    } else {
    }
    return
  }
  func.func @transform_0(%arg0: i32, %arg1: i32) -> (i32, i32) {
    %c0_i32 = arith.constant 0 : i32
    %c0_i32_0 = arith.constant 0 : i32
    return %arg0, %c0_i32 : i32, i32
  }
  func.func @transform_1(%arg0: i32, %arg1: i32) -> (i32, i32) {
    %c0_i32 = arith.constant 0 : i32
    %c0_i32_0 = arith.constant 0 : i32
    return %c0_i32, %arg1 : i32, i32
  }
  func.func @transform_2(%arg0: i32, %arg1: i32) -> (i32, i32) {
    %c0_i32 = arith.constant 0 : i32
    %c0_i32_0 = arith.constant 0 : i32
    return %c0_i32, %arg1 : i32, i32
  }
  func.func @transform_3(%arg0: i32, %arg1: i32) -> (i32, i32) {
    %c0_i32 = arith.constant 0 : i32
    %c0_i32_0 = arith.constant 0 : i32
    return %arg1, %c0_i32 : i32, i32
  }
  func.func @transform_4(%arg0: i32, %arg1: i32) -> (i32, i32) {
    %c0_i32 = arith.constant 0 : i32
    %c0_i32_0 = arith.constant 0 : i32
    %c0_i32_1 = arith.constant 0 : i32
    return %c0_i32, %c0_i32_0 : i32, i32
  }
  func.func @transform_5(%arg0: i32, %arg1: i32) -> (i32, i32) {
    %c0_i32 = arith.constant 0 : i32
    %c0_i32_0 = arith.constant 0 : i32
    return %arg0, %c0_i32 : i32, i32
  }
}

</mosaic_0001>

<llo_original>
// kernel: tpu_custom_call.1
$region0: #{tpu_custom_call.1}
  #allocation0 [shape = 'u32[]', space=smem, size = 0x4, offset = 0x4, fixed_abs, tag = 'smem constant byte address 0x4 - core index']
  #allocation1 [shape = 'u32[144,128]{1,0:T(1,128)}', space=vmem, size = 0x12000, scoped, tag = 'internal scratch']
  #allocation2 [shape = 'f32[16,128]{1,0:T(8,128)}', space=vmem, size = 0x2000, scoped, tag = 'scratch operand']
  %s0 = inlined_call_operand.hbm [shape: bf16[16,128], index: 0, kind: input, shape index: {}]
  %s1 = inlined_call_operand.hbm [shape: bf16[128,256], index: 1, kind: input, shape index: {}]
  %s2 = inlined_call_operand.vmem [shape: f32[1,256], index: 2, kind: input, shape index: {}]
  %s3 = inlined_call_operand.hbm [shape: bf16[128,128], index: 3, kind: input, shape index: {}]
  %s4 = inlined_call_operand.vmem [shape: f32[1,128], index: 4, kind: input, shape index: {}]
  %s5 = inlined_call_operand.hbm [shape: f32[16,128], index: 5, kind: output, shape index: {}]
  %s6 = sld [smem:[#allocation0]]
  $region50: #{tpu_custom_call.1} parent=0
    _
  %s8 = ssub.s32 1, %s6
  %s9 = scalar_select 0, %s8, %s6
  $region1: #{tpu_custom_call.1} parent=0
    #allocation3 [shape = 'u8[4096]{0}', space=vmem, size = 0x1000, scoped, tag = 'input window, operand 0, single buffered']
    #allocation4 [shape = 's32[1]{0}', space=sflag, size = 0x4, scoped, tag = 'scoped memory for tpu_custom_call.1']
    #allocation5 [shape = 's32[1]{0}', space=sflag, size = 0x4, scoped, tag = 'scoped memory for tpu_custom_call.1']
    #allocation6 [shape = 'u8[65536]{0}', space=vmem, size = 0x10000, scoped, tag = 'input window, operand 1, single buffered']
    #allocation7 [shape = 's32[1]{0}', space=sflag, size = 0x4, scoped, tag = 'scoped memory for tpu_custom_call.1']
    #allocation8 [shape = 'u8[32768]{0}', space=vmem, size = 0x8000, scoped, tag = 'input window, operand 3, single buffered']
    #allocation9 [shape = 'u8[8192]{0}', space=vmem, size = 0x2000, scoped, tag = 'output window, operand 0, single buffered']
    %10 = vsyncpa [#allocation4], 0
    %11 = vsyncpa [#allocation7], 0
    %12 = vsyncpa [#allocation5], 0
    // Predicated region
    $region2: #{tpu_custom_call.1} parent=1 // pred_check
      _
    $region3: #{tpu_custom_call.1} parent=1 // pred_check_branch
      %14 = sbr.rel (0) target = $region5
    $region4: #{tpu_custom_call.1} parent=1 // pred_region
      %s16 = ssub.s32 128, 128
      %17 = vsyncadd [#allocation4], %s16
      %s18 = sshll.u32 [#allocation3], 4
      %s19 = int_to_ptr.vmem [resolvable:$true] %s18
      %24 = dma.hbm_to_vmem [thread:$0]  %s0, 128, %s19, [#allocation4], 64, 64, 4
    $region5: #{tpu_custom_call.1} parent=1 // pred_fallthru
      _
    // Predicated region
    $region6: #{tpu_custom_call.1} parent=1 // pred_check
      _
    $region7: #{tpu_custom_call.1} parent=1 // pred_check_branch
      %26 = sbr.rel (0) target = $region9
    $region8: #{tpu_custom_call.1} parent=1 // pred_region
      %s28 = ssub.s32 2048, 2048
      %29 = vsyncadd [#allocation7], %s28
      %s30 = sshll.u32 [#allocation6], 4
      %s31 = int_to_ptr.vmem [resolvable:$true] %s30
      %36 = dma.hbm_to_vmem [thread:$0]  %s1, 2048, %s31, [#allocation7], 128, 128, 8
    $region9: #{tpu_custom_call.1} parent=1 // pred_fallthru
      _
    // Predicated region
    $region10: #{tpu_custom_call.1} parent=1 // pred_check
      _
    $region11: #{tpu_custom_call.1} parent=1 // pred_check_branch
      %38 = sbr.rel (0) target = $region13
    $region12: #{tpu_custom_call.1} parent=1 // pred_region
      _
    $region13: #{tpu_custom_call.1} parent=1 // pred_fallthru
      _
    // Predicated region
    $region14: #{tpu_custom_call.1} parent=1 // pred_check
      _
    $region15: #{tpu_custom_call.1} parent=1 // pred_check_branch
      %40 = sbr.rel (0) target = $region17
    $region16: #{tpu_custom_call.1} parent=1 // pred_region
      %s42 = ssub.s32 1024, 1024
      %43 = vsyncadd [#allocation7], %s42
      %s44 = sshll.u32 [#allocation8], 4
      %s45 = int_to_ptr.vmem [resolvable:$true] %s44
      %50 = dma.hbm_to_vmem [thread:$0]  %s3, 1024, %s45, [#allocation7], 64, 64, 4
    $region17: #{tpu_custom_call.1} parent=1 // pred_fallthru
      _
    // Predicated region
    $region18: #{tpu_custom_call.1} parent=1 // pred_check
      _
    $region19: #{tpu_custom_call.1} parent=1 // pred_check_branch
      %52 = sbr.rel (0) target = $region21
    $region20: #{tpu_custom_call.1} parent=1 // pred_region
      _
    $region21: #{tpu_custom_call.1} parent=1 // pred_fallthru
      _
    // Predicated region
    $region22: #{tpu_custom_call.1} parent=1 // pred_check
      _
    $region23: #{tpu_custom_call.1} parent=1 // pred_check_branch
      %54 = sbr.rel (0) target = $region25
    $region24: #{tpu_custom_call.1} parent=1 // pred_region
      %55 = dma.done [#allocation4], 128
    $region25: #{tpu_custom_call.1} parent=1 // pred_fallthru
      _
    // Predicated region
    $region26: #{tpu_custom_call.1} parent=1 // pred_check
      _
    $region27: #{tpu_custom_call.1} parent=1 // pred_check_branch
      %57 = sbr.rel (0) target = $region29
    $region28: #{tpu_custom_call.1} parent=1 // pred_region
      %58 = dma.done [#allocation7], 2048
    $region29: #{tpu_custom_call.1} parent=1 // pred_fallthru
      _
    // Predicated region
    $region30: #{tpu_custom_call.1} parent=1 // pred_check
      _
    $region31: #{tpu_custom_call.1} parent=1 // pred_check_branch
      %60 = sbr.rel (0) target = $region33
    $region32: #{tpu_custom_call.1} parent=1 // pred_region
      %61 = dma.done [#allocation7], 1024
    $region33: #{tpu_custom_call.1} parent=1 // pred_fallthru
      _
    %p63 = scmp.eq.s32.totalorder 0, 0
    // Predicated region
    $region34: #{tpu_custom_call.1} parent=1 // pred_check
      %p64 = pneg %p63
    $region35: #{tpu_custom_call.1} parent=1 // pred_check_branch
      %66 = sbr.rel (%p64) target = $region37
    $region36: #{tpu_custom_call.1} parent=1 // pred_region
      %v67 = vld [vmem:[%s4] sm:$0x1]
      %v69 = vlaneseq
      %v70 = vshrl.u32 %v69, 7
      %v71 = vsub.s32 0, %v70
      %v72 = vrot.slane %v67, %v71
      %v74 = vadd.f32 %v72, 0.0
      %75 = vst [vmem:[#allocation2] sm:$0xff] %v74
      %76 = vst [vmem:[#allocation2 + $0x8] sm:$0xff] %v74
    $region37: #{tpu_custom_call.1} parent=1 // pred_fallthru
      _
    %v77 = vld [vmem:[#allocation3] sm:$0xf]
    %v78 = vld [vmem:[#allocation3 + $0x4] sm:$0xf]
    %v79 = vld [vmem:[#allocation6] sm:$0xff]
    %v80 = vld [vmem:[#allocation6 + $0x8] sm:$0xff]
    %v81 = vld [vmem:[#allocation6 + $0x10] sm:$0xff]
    %v82 = vld [vmem:[#allocation6 + $0x18] sm:$0xff]
    %v83 = vld [vmem:[#allocation6 + $0x20] sm:$0xff]
    %v84 = vld [vmem:[#allocation6 + $0x28] sm:$0xff]
    %v85 = vld [vmem:[#allocation6 + $0x30] sm:$0xff]
    %v86 = vld [vmem:[#allocation6 + $0x38] sm:$0xff]
    %v87 = vld [vmem:[#allocation6 + $0x40] sm:$0xff]
    %v88 = vld [vmem:[#allocation6 + $0x48] sm:$0xff]
    %v89 = vld [vmem:[#allocation6 + $0x50] sm:$0xff]
    %v90 = vld [vmem:[#allocation6 + $0x58] sm:$0xff]
    %v91 = vld [vmem:[#allocation6 + $0x60] sm:$0xff]
    %v92 = vld [vmem:[#allocation6 + $0x68] sm:$0xff]
    %v93 = vld [vmem:[#allocation6 + $0x70] sm:$0xff]
    %v94 = vld [vmem:[#allocation6 + $0x78] sm:$0xff]
    %v95 = vld [vmem:[%s2] sm:$0x3]
    %v97 = vlaneseq
    %v98 = vshrl.u32 %v97, 7
    %v99 = vsub.s32 0, %v98
    %v100 = vrot.slane %v95, %v99
    %v101 = vlaneseq
    %v102 = vshrl.u32 %v101, 7
    %v103 = vsub.s32 1, %v102
    %v104 = vrot.slane %v95, %v103
    %v109 = vunpack.c.l.b16 %v77
    %v110 = vunpack.c.l.b16 %v78
    %v111 = vpack.c.b16 %v110, %v109
    %v129 = vunpack.c.l.b16 %v79
    %v130 = vunpack.c.h.b16 %v79
    %v131 = vunpack.c.l.b16 %v80
    %v132 = vunpack.c.h.b16 %v80
    %v133 = vunpack.c.l.b16 %v81
    %v134 = vunpack.c.h.b16 %v81
    %v135 = vunpack.c.l.b16 %v82
    %v136 = vunpack.c.h.b16 %v82
    %v137 = vunpack.c.l.b16 %v83
    %v138 = vunpack.c.h.b16 %v83
    %v139 = vunpack.c.l.b16 %v84
    %v140 = vunpack.c.h.b16 %v84
    %v141 = vunpack.c.l.b16 %v85
    %v142 = vunpack.c.h.b16 %v85
    %v143 = vunpack.c.l.b16 %v86
    %v144 = vunpack.c.h.b16 %v86
    %v145 = vunpack.c.l.b16 %v87
    %v146 = vunpack.c.h.b16 %v87
    %v147 = vunpack.c.l.b16 %v88
    %v148 = vunpack.c.h.b16 %v88
    %v149 = vunpack.c.l.b16 %v89
    %v150 = vunpack.c.h.b16 %v89
    %v151 = vunpack.c.l.b16 %v90
    %v152 = vunpack.c.h.b16 %v90
    %v153 = vunpack.c.l.b16 %v91
    %v154 = vunpack.c.h.b16 %v91
    %v155 = vunpack.c.l.b16 %v92
    %v156 = vunpack.c.h.b16 %v92
    %v157 = vunpack.c.l.b16 %v93
    %v158 = vunpack.c.h.b16 %v93
    %v159 = vunpack.c.l.b16 %v94
    %v160 = vunpack.c.h.b16 %v94
    %v161 = vpack.c.b16 %v131, %v129
    %v162 = vpack.c.b16 %v132, %v130
    %v163 = vpack.c.b16 %v135, %v133
    %v164 = vpack.c.b16 %v136, %v134
    %v165 = vpack.c.b16 %v139, %v137
    %v166 = vpack.c.b16 %v140, %v138
    %v167 = vpack.c.b16 %v143, %v141
    %v168 = vpack.c.b16 %v144, %v142
    %v169 = vpack.c.b16 %v147, %v145
    %v170 = vpack.c.b16 %v148, %v146
    %v171 = vpack.c.b16 %v151, %v149
    %v172 = vpack.c.b16 %v152, %v150
    %v173 = vpack.c.b16 %v155, %v153
    %v174 = vpack.c.b16 %v156, %v154
    %v175 = vpack.c.b16 %v159, %v157
    %v176 = vpack.c.b16 %v160, %v158
    %193 = vmatprep.subr.bf16.mxu0 %v162
    %194 = vmatpush1.bf16.msra.mxu0 %v161
    %195 = vmatprep.subr.bf16.mxu0 %v164
    %196 = vmatpush1.bf16.msra.mxu0 %v163
    %197 = vmatprep.subr.bf16.mxu0 %v166
    %198 = vmatpush1.bf16.msra.mxu0 %v165
    %199 = vmatprep.subr.bf16.mxu0 %v168
    %200 = vmatpush1.bf16.msra.mxu0 %v167
    %201 = vmatprep.subr.bf16.mxu0 %v170
    %202 = vmatpush1.bf16.msra.mxu0 %v169
    %203 = vmatprep.subr.bf16.mxu0 %v172
    %204 = vmatpush1.bf16.msra.mxu0 %v171
    %205 = vmatprep.subr.bf16.mxu0 %v174
    %206 = vmatpush1.bf16.msra.mxu0 %v173
    %207 = vmatprep.subr.bf16.mxu0 %v176
    %208 = vmatpush1.bf16.msra.mxu0 %v175
    %209 = vmatprep.subr.bf16.mxu0 0
    %210 = vmatpush1.bf16.msra.mxu0 0
    %211 = vmatprep.subr.bf16.mxu0 0
    %212 = vmatpush1.bf16.msra.mxu0 0
    %213 = vmatprep.subr.bf16.mxu0 0
    %214 = vmatpush1.bf16.msra.mxu0 0
    %215 = vmatprep.subr.bf16.mxu0 0
    %216 = vmatpush1.bf16.msra.mxu0 0
    %217 = vmatprep.subr.bf16.mxu0 0
    %218 = vmatpush1.bf16.msra.mxu0 0
    %219 = vmatprep.subr.bf16.mxu0 0
    %220 = vmatpush1.bf16.msra.mxu0 0
    %221 = vmatprep.subr.bf16.mxu0 0
    %222 = vmatpush1.bf16.msra.mxu0 0
    %223 = vmatprep.subr.bf16.mxu0 0
    %224 = vmatpush1.bf16.msra.mxu0 0
    %225 = vmatprep.mubr.bf16.mxu0 0
    %226 = vmatmul.mubr.bf16.gmra.mrb[0].mxu0 %v111
    %v227 = vpop.f32.mrb[0].mxu0
    %v228 = vadd.f32 %v100, %v227
    %v229 = vpop.f32.mrb[0].mxu0
    %v230 = vadd.f32 %v104, %v229
    %v231 = vpop.f32.mrb[0].mxu0
    %v232 = vadd.f32 %v100, %v231
    %v233 = vpop.f32.mrb[0].mxu0
    %v234 = vadd.f32 %v104, %v233
    %235 = vdwg.mxu0
    %v236 = vxor.u32 %v228, 2147483648
    %v237 = vxor.u32 %v232, 2147483648
    %v238 = vmul.f32 %v236, 1.442695
    %v239 = vpow.pop %v238
    %v240 = vmul.f32 %v237, 1.442695
    %v241 = vpow.pop %v240
    %v242 = vadd.f32 %v239, 1.0
    %v243 = vadd.f32 %v241, 1.0
    %v244 = vrcp.pop %v242
    %v245 = vmul.f32 1.0, %v244
    %v246 = vrcp.pop %v243
    %v247 = vmul.f32 1.0, %v246
    %v248 = vmul.f32 %v228, %v245
    %v249 = vmul.f32 %v232, %v247
    %v250 = vmul.f32 %v248, %v230
    %v251 = vmul.f32 %v249, %v234
    %v252 = vld [vmem:[#allocation2] sm:$0xff]
    %v253 = vld [vmem:[#allocation2 + $0x8] sm:$0xff]
    %v254 = vpack.c.bf16 %v251, %v250
    %v255 = vld [vmem:[#allocation8] sm:$0xf]
    %v256 = vld [vmem:[#allocation8 + $0x4] sm:$0xf]
    %v257 = vld [vmem:[#allocation8 + $0x8] sm:$0xf]
    %v258 = vld [vmem:[#allocation8 + $0xc] sm:$0xf]
    %v259 = vld [vmem:[#allocation8 + $0x10] sm:$0xf]
    %v260 = vld [vmem:[#allocation8 + $0x14] sm:$0xf]
    %v261 = vld [vmem:[#allocation8 + $0x18] sm:$0xf]
    %v262 = vld [vmem:[#allocation8 + $0x1c] sm:$0xf]
    %v263 = vld [vmem:[#allocation8 + $0x20] sm:$0xf]
    %v264 = vld [vmem:[#allocation8 + $0x24] sm:$0xf]
    %v265 = vld [vmem:[#allocation8 + $0x28] sm:$0xf]
    %v266 = vld [vmem:[#allocation8 + $0x2c] sm:$0xf]
    %v267 = vld [vmem:[#allocation8 + $0x30] sm:$0xf]
    %v268 = vld [vmem:[#allocation8 + $0x34] sm:$0xf]
    %v269 = vld [vmem:[#allocation8 + $0x38] sm:$0xf]
    %v270 = vld [vmem:[#allocation8 + $0x3c] sm:$0xf]
    %v287 = vunpack.c.l.b16 %v255
    %v288 = vunpack.c.l.b16 %v256
    %v289 = vunpack.c.l.b16 %v257
    %v290 = vunpack.c.l.b16 %v258
    %v291 = vunpack.c.l.b16 %v259
    %v292 = vunpack.c.l.b16 %v260
    %v293 = vunpack.c.l.b16 %v261
    %v294 = vunpack.c.l.b16 %v262
    %v295 = vunpack.c.l.b16 %v263
    %v296 = vunpack.c.l.b16 %v264
    %v297 = vunpack.c.l.b16 %v265
    %v298 = vunpack.c.l.b16 %v266
    %v299 = vunpack.c.l.b16 %v267
    %v300 = vunpack.c.l.b16 %v268
    %v301 = vunpack.c.l.b16 %v269
    %v302 = vunpack.c.l.b16 %v270
    %v303 = vpack.c.b16 %v288, %v287
    %v304 = vpack.c.b16 %v290, %v289
    %v305 = vpack.c.b16 %v292, %v291
    %v306 = vpack.c.b16 %v294, %v293
    %v307 = vpack.c.b16 %v296, %v295
    %v308 = vpack.c.b16 %v298, %v297
    %v309 = vpack.c.b16 %v300, %v299
    %v310 = vpack.c.b16 %v302, %v301
    %319 = vmatprep.subr.bf16.mxu0 0
    %320 = vmatpush1.bf16.msra.mxu0 %v303
    %321 = vmatprep.subr.bf16.mxu0 0
    %322 = vmatpush1.bf16.msra.mxu0 %v304
    %323 = vmatprep.subr.bf16.mxu0 0
    %324 = vmatpush1.bf16.msra.mxu0 %v305
    %325 = vmatprep.subr.bf16.mxu0 0
    %326 = vmatpush1.bf16.msra.mxu0 %v306
    %327 = vmatprep.subr.bf16.mxu0 0
    %328 = vmatpush1.bf16.msra.mxu0 %v307
    %329 = vmatprep.subr.bf16.mxu0 0
    %330 = vmatpush1.bf16.msra.mxu0 %v308
    %331 = vmatprep.subr.bf16.mxu0 0
    %332 = vmatpush1.bf16.msra.mxu0 %v309
    %333 = vmatprep.subr.bf16.mxu0 0
    %334 = vmatpush1.bf16.msra.mxu0 %v310
    %335 = vmatprep.subr.bf16.mxu0 0
    %336 = vmatpush1.bf16.msra.mxu0 0
    %337 = vmatprep.subr.bf16.mxu0 0
    %338 = vmatpush1.bf16.msra.mxu0 0
    %339 = vmatprep.subr.bf16.mxu0 0
    %340 = vmatpush1.bf16.msra.mxu0 0
    %341 = vmatprep.subr.bf16.mxu0 0
    %342 = vmatpush1.bf16.msra.mxu0 0
    %343 = vmatprep.subr.bf16.mxu0 0
    %344 = vmatpush1.bf16.msra.mxu0 0
    %345 = vmatprep.subr.bf16.mxu0 0
    %346 = vmatpush1.bf16.msra.mxu0 0
    %347 = vmatprep.subr.bf16.mxu0 0
    %348 = vmatpush1.bf16.msra.mxu0 0
    %349 = vmatprep.subr.bf16.mxu0 0
    %350 = vmatpush1.bf16.msra.mxu0 0
    %351 = vmatprep.mubr.bf16.mxu0 0
    %352 = vmatmul.mubr.bf16.gmra.mrb[0].mxu0 %v254
    %v353 = vpop.f32.mrb[0].mxu0
    %v354 = vadd.f32 0.0, %v353
    %v355 = vpop.f32.mrb[0].mxu0
    %v356 = vpop.f32.mrb[0].mxu0
    %v357 = vadd.f32 0.0, %v356
    %v358 = vpop.f32.mrb[0].mxu0
    %359 = vdwg.mxu0
    %v360 = vadd.f32 %v252, %v354
    %v361 = vadd.f32 %v253, %v357
    %362 = vst [vmem:[#allocation2] sm:$0xff] %v360
    %363 = vst [vmem:[#allocation2 + $0x8] sm:$0xff] %v361
    // Predicated region
    $region38: #{tpu_custom_call.1} parent=1 // pred_check
      %p364 = pneg %p63
    $region39: #{tpu_custom_call.1} parent=1 // pred_check_branch
      %366 = sbr.rel (%p364) target = $region41
    $region40: #{tpu_custom_call.1} parent=1 // pred_region
      %v367 = vld [vmem:[#allocation2] sm:$0xff]
      %v368 = vld [vmem:[#allocation2 + $0x8] sm:$0xff]
      %369 = vst [vmem:[#allocation9] sm:$0xff] %v367
      %370 = vst [vmem:[#allocation9 + $0x8] sm:$0xff] %v368
    $region41: #{tpu_custom_call.1} parent=1 // pred_fallthru
      _
    // Predicated region
    $region42: #{tpu_custom_call.1} parent=1 // pred_check
      _
    $region43: #{tpu_custom_call.1} parent=1 // pred_check_branch
      %372 = sbr.rel (0) target = $region45
    $region44: #{tpu_custom_call.1} parent=1 // pred_region
      %s374 = ssub.s32 256, 256
      %375 = vsyncadd [#allocation5], %s374
      %s376 = sshll.u32 [#allocation9], 4
      %s377 = int_to_ptr.vmem [resolvable:$true] %s376
      %382 = dma.vmem_to_hbm [thread:$0]  %s377, 256, %s5, [#allocation5], 128, 128, 8
    $region45: #{tpu_custom_call.1} parent=1 // pred_fallthru
      _
    // Predicated region
    $region46: #{tpu_custom_call.1} parent=1 // pred_check
      _
    $region47: #{tpu_custom_call.1} parent=1 // pred_check_branch
      %384 = sbr.rel (0) target = $region49
    $region48: #{tpu_custom_call.1} parent=1 // pred_region
      %385 = dma.done [#allocation5], 256
    $region49: #{tpu_custom_call.1} parent=1 // pred_fallthru
      _
    %386 = vsyncpa [#allocation4], 1
    %387 = vsyncpa [#allocation7], 1
    %388 = vsyncpa [#allocation5], 1

</llo_original>
